<compile_context>
chip_gen: v7x
topology: tpu7x:2x2x1
jax: 0.10.0
libtpu: 0.0.40
codegen_flags: <defaults>
</compile_context>

<pallas_src>
import functools

import numpy as np
import jax
import jax.numpy as jnp
from jax import lax
from jax.experimental import pallas as pl
from jax.experimental.pallas import tpu as pltpu


def _round_up(x, m):
    return (x + m - 1) // m * m


def _device_kind():
    try:
        return jax.devices()[0].device_kind.lower()
    except Exception:
        return ""


def _hint_multiple(x, m):
    # pl.multiple_of is an alignment hint for dynamic slice starts; only apply
    # it to traced values (static Python ints are already known to Mosaic).
    return x if isinstance(x, int) else pl.multiple_of(x, m)


def _mulcon_kernel(lab_col_ref, lab_row_ref, k_ref, out_ref, sim_ref, *, inv_temp):
    """Partial mulCon loss total for query rows [i*TM, (i+1)*TM).

    lab_col_ref : [TM, 1]             int32 class id of the query slot, -1 => not
                                      selected by `labels == 1` (or padding).
    lab_row_ref : [num_tiles, 1, TN]  same encoding for every key column.
    k_ref       : [n_pad, dim]        pre-normalised features (f32 or bf16); the
                                      query block is a row slice of this buffer.
    out_ref     : [1, 8, 128]         lane-dense partial-sum block (scalar splat).
    sim_ref     : [num_tiles, TM, TN] f32 VMEM scratch holding this row-block's
                                      similarity tiles between the two passes.
    """
    num_tiles, tm, tn = sim_ref.shape
    i0 = pl.program_id(0)

    # Query block = row slice of the resident (already normalised) key buffer.
    row0 = pl.multiple_of(i0 * tm, tm)
    q = k_ref[pl.ds(row0, tm), :]                                   # [tm, dim]

    lab_q = lab_col_ref[...]                                        # [tm, 1]
    q_valid = lab_q >= 0                                            # [tm, 1]
    row_ids = i0 * tm + lax.broadcasted_iota(jnp.int32, (tm, 1), 0)  # [tm, 1]

    def col_masks(j):
        """Per-column-tile labels and the shared valid/off-diagonal base mask."""
        lab_k = lab_row_ref[j]                                      # [1, tn]
        col_ids = j * tn + lax.broadcasted_iota(jnp.int32, (1, tn), 1)
        base = jnp.logical_and(q_valid, lab_k >= 0)                 # both selected
        base = jnp.logical_and(base, row_ids != col_ids)            # off-diagonal
        return lab_k, base

    # ---- Pass 1: sim tiles -> scratch; accumulate per-row negative-pair sums:
    #      ns_i = sum_j exp(sim_ij / T) over valid, off-diagonal, different-class j.
    def pass1(j, ns):
        lab_k, base = col_masks(j)
        k_tile = k_ref[pl.ds(_hint_multiple(j * tn, tn), tn), :]    # [tn, dim]
        # Contract the feature axis of both operands (A @ B^T): the MXU's
        # native transposed-RHS form, so no wrapper/in-kernel transpose needed.
        sim = lax.dot_general(q, k_tile, (((1,), (1,)), ((), ())),
                              preferred_element_type=jnp.float32)   # [tm, tn]
        sim_ref[j] = sim
        neg = jnp.logical_and(base, lab_q != lab_k)
        e_neg = jnp.where(neg, jnp.exp(sim * inv_temp), 0.0)
        return ns + jnp.sum(e_neg, axis=1, keepdims=True)

    ns0 = jnp.zeros((tm, 1), jnp.float32)
    if num_tiles == 1:
        ns = pass1(0, ns0)
    else:
        ns = lax.fori_loop(0, num_tiles, pass1, ns0)

    # ---- Pass 2: positive-pair loss  -log(e / (e + ns)) = log(e + ns) - sim/T.
    def pass2(j, acc):
        lab_k, base = col_masks(j)
        sim = sim_ref[j]                                            # [tm, tn]
        pos = jnp.logical_and(base, lab_q == lab_k)
        e = jnp.exp(sim * inv_temp)
        denom = jnp.where(pos, e + ns, 1.0)        # guard: log never sees 0
        loss = jnp.where(pos, jnp.log(denom) - sim * inv_temp, 0.0)
        return acc + jnp.sum(loss, axis=1, keepdims=True)

    acc0 = jnp.zeros((tm, 1), jnp.float32)
    if num_tiles == 1:
        acc = pass2(0, acc0)
    else:
        acc = lax.fori_loop(0, num_tiles, pass2, acc0)

    out_ref[...] = jnp.full((1, 8, 128), jnp.sum(acc), dtype=jnp.float32)


@functools.partial(
    jax.jit,
    static_argnames=("temperature", "use_bf16_matmul", "single_buffer_consts"))
def _mulcon_impl(features, labels, temperature, use_bf16_matmul,
                 single_buffer_consts):
    b, c, dim = features.shape
    n_total = b * c

    # Static-shape "selection": class id where labels==1, -1 elsewhere (padding
    # rows/cols also encode -1).  Replaces torch.nonzero with in-kernel masking.
    class_ids = jnp.broadcast_to(jnp.arange(c, dtype=jnp.int32)[None, :],
                                 (b, c)).reshape(-1)
    enc = jnp.where(labels.reshape(-1) == 1, class_ids, jnp.int32(-1))

    # Cosine normalisation once, in the wrapper (f32); optional bf16 MXU inputs
    # are cast here too so DMA + resident key VMEM bytes halve.
    feats = features.reshape(n_total, dim).astype(jnp.float32)
    feats = feats * lax.rsqrt(jnp.sum(feats * feats, axis=1, keepdims=True) + 1e-16)
    if use_bf16_matmul:
        feats = feats.astype(jnp.bfloat16)

    # Generation-aware row tile + VMEM limit.
    kind = _device_kind()
    if "v7" in kind or "7x" in kind:
        tm_pref, vmem_limit = 256, 48 * 1024 * 1024      # 64 MiB physical VMEM
    elif "v6" in kind:
        tm_pref, vmem_limit = 256, 96 * 1024 * 1024
    elif "v5" in kind:
        tm_pref, vmem_limit = 128, 96 * 1024 * 1024      # 4x128x128 MXU
    else:
        tm_pref, vmem_limit = 128, 32 * 1024 * 1024      # conservative default

    tm = min(tm_pref, _round_up(n_total, 8))
    n_pad = _round_up(n_total, tm)
    if n_pad <= 512:
        tn = n_pad                                       # single column tile
    else:
        # Largest column tile <= 512 that is a multiple of 128 and divides
        # n_pad (n_pad is a multiple of tm in {128, 256} here).
        units = n_pad // 128
        tn = 128
        for g in (4, 2):
            if units % g == 0:
                tn = 128 * g
                break
    num_tiles = n_pad // tn
    grid_m = n_pad // tm

    pad = n_pad - n_total
    if pad:
        feats = jnp.pad(feats, ((0, pad), (0, 0)))
        enc = jnp.pad(enc, (0, pad), constant_values=-1)
    lab_col = enc.reshape(n_pad, 1)
    lab_row = enc.reshape(num_tiles, 1, tn)

    def const_spec(shape):
        # Constant-index blocks never change across the grid: request single
        # buffering so they are not double-buffered in VMEM.
        if single_buffer_consts:
            return pl.BlockSpec(shape, lambda i: (0,) * len(shape),
                                pipeline_mode=pl.Buffered(1))
        return pl.BlockSpec(shape, lambda i: (0,) * len(shape))

    kernel = functools.partial(_mulcon_kernel, inv_temp=1.0 / float(temperature))

    partials = pl.pallas_call(
        kernel,
        out_shape=jax.ShapeDtypeStruct((grid_m, 8, 128), jnp.float32),
        grid=(grid_m,),
        in_specs=[
            pl.BlockSpec((tm, 1), lambda i: (i, 0)),     # query-block labels
            const_spec((num_tiles, 1, tn)),              # all key labels
            const_spec((n_pad, dim)),                    # normalised features
        ],
        out_specs=pl.BlockSpec((1, 8, 128), lambda i: (i, 0, 0)),
        scratch_shapes=[pltpu.VMEM((num_tiles, tm, tn), jnp.float32)],
        compiler_params=pltpu.CompilerParams(
            dimension_semantics=("parallel",),
            vmem_limit_bytes=vmem_limit,
        ),
    )(lab_col, lab_row, feats)

    total = jnp.sum(partials[:, 0, 0])

    # Denominator: same-class off-diagonal pairs among selected slots
    # (mask-derived).  Torch's count_nonzero(loss) additionally drops positive
    # pairs whose row has zero negatives (loss exactly 0) — identical for all
    # non-degenerate inputs.
    m_per_class = jnp.sum((labels == 1).astype(jnp.float32), axis=0)    # [c]
    count = jnp.sum(m_per_class * (m_per_class - 1.0))

    # No positive pairs -> torch would produce nan (0/0); return 0 instead.
    return jnp.where(count > 0, total / count, jnp.float32(0.0))


def mulcon_loss(features, labels, temperature=0.5, use_bf16_matmul=False):
    """features [b, c, dim] float, labels [b, c] in {0, 1}. Returns scalar loss."""
    try:
        return _mulcon_impl(features, labels, temperature=float(temperature),
                            use_bf16_matmul=bool(use_bf16_matmul),
                            single_buffer_consts=True)
    except Exception:
        # pl.Buffered(1) (single-buffered constant operands) unsupported on this
        # jax/backend combination -> fall back to default double buffering.
        return _mulcon_impl(features, labels, temperature=float(temperature),
                            use_bf16_matmul=bool(use_bf16_matmul),
                            single_buffer_consts=False)


def _mulcon_ref(features, labels, temperature=0.5):
    """Pure-numpy reference of the PyTorch forward (float64)."""
    features = np.asarray(features, dtype=np.float64)
    labels = np.asarray(labels)
    bidx, cidx = np.nonzero(labels == 1)
    f = features[bidx, cidx, :]
    lab = cidx
    n = lab.shape[0]
    mask = (lab[:, None] == lab[None, :]).astype(np.float64)
    norm = np.linalg.norm(f, axis=1, keepdims=True)
    fn = f / np.maximum(norm, 1e-8)
    sim_mat = fn @ fn.T
    eye = np.eye(n)
    sm = np.exp(sim_mat / temperature) * (1.0 - eye)
    sim = mask * sm
    non_sim = sm - sim
    no_sim_sum = non_sim.sum(axis=1, keepdims=True)
    sim_sum = sim + no_sim_sum
    with np.errstate(divide="ignore", invalid="ignore"):
        loss = np.where(sim_sum > 0, sim / sim_sum, 0.0)
    loss = (1.0 - mask) + loss + eye
    loss = -np.log(loss)
    return loss.sum() / np.count_nonzero(loss)


if __name__ == "__main__":
    key = jax.random.PRNGKey(0)
    b, c, dim = 2, 4, 32
    features = jax.random.normal(key, (b, c, dim), dtype=jnp.float32)
    # deterministic multi-label pattern: classes 0 and 3 appear twice
    # (positive pairs), classes 1 and 2 once each.
    labels = jnp.array([[1, 0, 1, 1],
                        [1, 1, 0, 1]], dtype=jnp.int32)

    out = mulcon_loss(features, labels, temperature=0.5)
    out = jax.block_until_ready(out)

    ref = _mulcon_ref(np.asarray(features), np.asarray(labels), temperature=0.5)
    assert np.allclose(np.asarray(out, dtype=np.float64), ref, rtol=1e-3, atol=1e-3), (
        float(out), float(ref))
    print("KERNEL_OK")
</pallas_src>

<mosaic_0001>
module attributes {stable_mosaic.version = 11 : i64} {
  func.func @_mulcon_kernel(%arg0: i32, %arg1: memref<8x1xi32, #tpu.memory_space<vmem>>, %arg2: memref<1x1x8xi32, #tpu.memory_space<vmem>>, %arg3: memref<8x32xf32, #tpu.memory_space<vmem>>, %arg4: memref<1x8x128xf32, #tpu.memory_space<vmem>>, %arg5: memref<1x8x8xf32, #tpu.memory_space<vmem>>) attributes {dimension_semantics = [#tpu.dimension_semantics<parallel>], iteration_bounds = array<i64: 1>, scalar_prefetch = 0 : i64, scratch_operands = 1 : i64, tpu.core_type = #tpu.core_type<tc>, window_params = [{transform_indices = @transform_0, window_bounds = array<i64: 8, 1>}, {pipeline_mode = #tpu.pipeline_mode<synchronous>, transform_indices = @transform_1, window_bounds = array<i64: 1, 1, 8>}, {pipeline_mode = #tpu.pipeline_mode<synchronous>, transform_indices = @transform_2, window_bounds = array<i64: 8, 32>}, {transform_indices = @transform_3, window_bounds = array<i64: 1, 8, 128>}]} {
    %c8_i32 = arith.constant 8 : i32
    %0 = arith.muli %arg0, %c8_i32 : i32
    %1 = tpu.assume_multiple %0, 8 : i32
    %2 = arith.index_cast %1 : i32 to index
    %c0 = arith.constant 0 : index
    %3 = vector.load %arg3[%2, %c0] : memref<8x32xf32, #tpu.memory_space<vmem>>, vector<8x32xf32>
    %c0_0 = arith.constant 0 : index
    %c0_1 = arith.constant 0 : index
    %4 = vector.load %arg1[%c0_0, %c0_1] : memref<8x1xi32, #tpu.memory_space<vmem>>, vector<8x1xi32>
    %c0_i32 = arith.constant 0 : i32
    %5 = vector.broadcast %c0_i32 : i32 to vector<8x1xi32>
    %6 = arith.cmpi sge, %4, %5 : vector<8x1xi32>
    %c8_i32_2 = arith.constant 8 : i32
    %7 = arith.muli %arg0, %c8_i32_2 : i32
    %8 = tpu.iota {dimensions = array<i32: 0>} : vector<8x1xi32>
    %9 = vector.broadcast %7 : i32 to vector<8x1xi32>
    %10 = arith.addi %9, %8 : vector<8x1xi32>
    %cst = arith.constant 0.000000e+00 : f32
    %11 = vector.broadcast %cst : f32 to vector<8x1xf32>
    %c0_3 = arith.constant 0 : index
    %c0_4 = arith.constant 0 : index
    %c0_5 = arith.constant 0 : index
    %12 = vector.load %arg2[%c0_3, %c0_4, %c0_5] : memref<1x1x8xi32, #tpu.memory_space<vmem>>, vector<1x1x8xi32>
    %13 = vector.shape_cast %12 : vector<1x1x8xi32> to vector<1x8xi32>
    %14 = tpu.iota {dimensions = array<i32: 1>} : vector<1x8xi32>
    %c0_i32_6 = arith.constant 0 : i32
    %15 = vector.broadcast %c0_i32_6 : i32 to vector<1x8xi32>
    %16 = arith.addi %15, %14 : vector<1x8xi32>
    %c0_i32_7 = arith.constant 0 : i32
    %17 = vector.broadcast %c0_i32_7 : i32 to vector<1x8xi32>
    %18 = arith.cmpi sge, %13, %17 : vector<1x8xi32>
    %19 = vector.broadcast %6 : vector<8x1xi1> to vector<8x8xi1>
    %20 = vector.broadcast %18 : vector<1x8xi1> to vector<8x8xi1>
    %21 = arith.andi %19, %20 : vector<8x8xi1>
    %22 = vector.broadcast %10 : vector<8x1xi32> to vector<8x8xi32>
    %23 = vector.broadcast %16 : vector<1x8xi32> to vector<8x8xi32>
    %24 = arith.cmpi ne, %22, %23 : vector<8x8xi32>
    %25 = arith.andi %21, %24 : vector<8x8xi1>
    %c0_8 = arith.constant 0 : index
    %c0_9 = arith.constant 0 : index
    %26 = vector.load %arg3[%c0_8, %c0_9] : memref<8x32xf32, #tpu.memory_space<vmem>>, vector<8x32xf32>
    %cst_10 = arith.constant dense<0.000000e+00> : vector<8x8xf32>
    %27 = tpu.matmul %3, %26, %cst_10 {dimension_numbers = #tpu.dot_dimension_numbers<[1], [1], [0], [0], [0, 0, 1, 0], [], []>} : vector<8x32xf32>, vector<8x32xf32>, vector<8x8xf32> -> vector<8x8xf32>
    %c0_11 = arith.constant 0 : index
    %c0_12 = arith.constant 0 : index
    %c0_13 = arith.constant 0 : index
    %28 = vector.load %arg5[%c0_11, %c0_12, %c0_13] : memref<1x8x8xf32, #tpu.memory_space<vmem>>, vector<1x8x8xf32>
    %29 = vector.shape_cast %28 : vector<1x8x8xf32> to vector<8x8xf32>
    %30 = vector.shape_cast %27 : vector<8x8xf32> to vector<1x8x8xf32>
    tpu.vector_store %arg5[%c0_11, %c0_12, %c0_13], %30 {strides = array<i32>} : memref<1x8x8xf32, #tpu.memory_space<vmem>>, vector<1x8x8xf32>,
    %31 = vector.broadcast %4 : vector<8x1xi32> to vector<8x8xi32>
    %32 = vector.broadcast %13 : vector<1x8xi32> to vector<8x8xi32>
    %33 = arith.cmpi ne, %31, %32 : vector<8x8xi32>
    %34 = arith.andi %25, %33 : vector<8x8xi1>
    %cst_14 = arith.constant 2.000000e+00 : f32
    %35 = vector.broadcast %cst_14 : f32 to vector<8x8xf32>
    %36 = arith.mulf %27, %35 : vector<8x8xf32>
    %37 = math.exp %36 : vector<8x8xf32>
    %cst_15 = arith.constant 0.000000e+00 : f32
    %38 = vector.broadcast %cst_15 : f32 to vector<8x8xf32>
    %39 = arith.select %34, %37, %38 : vector<8x8xi1>, vector<8x8xf32>
    %cst_16 = arith.constant dense<0.000000e+00> : vector<8xf32>
    %40 = vector.multi_reduction <add>, %39, %cst_16 [1] : vector<8x8xf32> to vector<8xf32>
    %41 = vector.shape_cast %40 : vector<8xf32> to vector<8x1xf32>
    %42 = arith.addf %11, %41 : vector<8x1xf32>
    %cst_17 = arith.constant 0.000000e+00 : f32
    %43 = vector.broadcast %cst_17 : f32 to vector<8x1xf32>
    %c0_18 = arith.constant 0 : index
    %c0_19 = arith.constant 0 : index
    %c0_20 = arith.constant 0 : index
    %44 = vector.load %arg2[%c0_18, %c0_19, %c0_20] : memref<1x1x8xi32, #tpu.memory_space<vmem>>, vector<1x1x8xi32>
    %45 = vector.shape_cast %44 : vector<1x1x8xi32> to vector<1x8xi32>
    %46 = tpu.iota {dimensions = array<i32: 1>} : vector<1x8xi32>
    %c0_i32_21 = arith.constant 0 : i32
    %47 = vector.broadcast %c0_i32_21 : i32 to vector<1x8xi32>
    %48 = arith.addi %47, %46 : vector<1x8xi32>
    %c0_i32_22 = arith.constant 0 : i32
    %49 = vector.broadcast %c0_i32_22 : i32 to vector<1x8xi32>
    %50 = arith.cmpi sge, %45, %49 : vector<1x8xi32>
    %51 = vector.broadcast %6 : vector<8x1xi1> to vector<8x8xi1>
    %52 = vector.broadcast %50 : vector<1x8xi1> to vector<8x8xi1>
    %53 = arith.andi %51, %52 : vector<8x8xi1>
    %54 = vector.broadcast %10 : vector<8x1xi32> to vector<8x8xi32>
    %55 = vector.broadcast %48 : vector<1x8xi32> to vector<8x8xi32>
    %56 = arith.cmpi ne, %54, %55 : vector<8x8xi32>
    %57 = arith.andi %53, %56 : vector<8x8xi1>
    %c0_23 = arith.constant 0 : index
    %c0_24 = arith.constant 0 : index
    %c0_25 = arith.constant 0 : index
    %58 = vector.load %arg5[%c0_23, %c0_24, %c0_25] : memref<1x8x8xf32, #tpu.memory_space<vmem>>, vector<1x8x8xf32>
    %59 = vector.shape_cast %58 : vector<1x8x8xf32> to vector<8x8xf32>
    %60 = vector.broadcast %4 : vector<8x1xi32> to vector<8x8xi32>
    %61 = vector.broadcast %45 : vector<1x8xi32> to vector<8x8xi32>
    %62 = arith.cmpi eq, %60, %61 : vector<8x8xi32>
    %63 = arith.andi %57, %62 : vector<8x8xi1>
    %cst_26 = arith.constant 2.000000e+00 : f32
    %64 = vector.broadcast %cst_26 : f32 to vector<8x8xf32>
    %65 = arith.mulf %59, %64 : vector<8x8xf32>
    %66 = math.exp %65 : vector<8x8xf32>
    %67 = vector.broadcast %42 : vector<8x1xf32> to vector<8x8xf32>
    %68 = arith.addf %66, %67 : vector<8x8xf32>
    %cst_27 = arith.constant 1.000000e+00 : f32
    %69 = vector.broadcast %cst_27 : f32 to vector<8x8xf32>
    %70 = arith.select %63, %68, %69 : vector<8x8xi1>, vector<8x8xf32>
    %71 = math.log %70 : vector<8x8xf32>
    %cst_28 = arith.constant 2.000000e+00 : f32
    %72 = vector.broadcast %cst_28 : f32 to vector<8x8xf32>
    %73 = arith.mulf %59, %72 : vector<8x8xf32>
    %74 = arith.subf %71, %73 : vector<8x8xf32>
    %cst_29 = arith.constant 0.000000e+00 : f32
    %75 = vector.broadcast %cst_29 : f32 to vector<8x8xf32>
    %76 = arith.select %63, %74, %75 : vector<8x8xi1>, vector<8x8xf32>
    %cst_30 = arith.constant dense<0.000000e+00> : vector<8xf32>
    %77 = vector.multi_reduction <add>, %76, %cst_30 [1] : vector<8x8xf32> to vector<8xf32>
    %78 = vector.shape_cast %77 : vector<8xf32> to vector<8x1xf32>
    %79 = arith.addf %43, %78 : vector<8x1xf32>
    %80 = vector.shape_cast %79 : vector<8x1xf32> to vector<1x8x1xf32>
    %cst_31 = arith.constant dense<0.000000e+00> : vector<1xf32>
    %81 = vector.multi_reduction <add>, %80, %cst_31 [1, 2] : vector<1x8x1xf32> to vector<1xf32>
    %82 = vector.shape_cast %81 : vector<1xf32> to vector<1x1x1xf32>
    %83 = vector.extract %82[0, 0, 0] : f32 from vector<1x1x1xf32>
    %84 = vector.broadcast %83 : f32 to vector<1x8x128xf32>
    %c0_32 = arith.constant 0 : index
    %c0_33 = arith.constant 0 : index
    %c0_34 = arith.constant 0 : index
    %85 = vector.load %arg4[%c0_32, %c0_33, %c0_34] : memref<1x8x128xf32, #tpu.memory_space<vmem>>, vector<1x8x128xf32>
    tpu.vector_store %arg4[%c0_32, %c0_33, %c0_34], %84 {strides = array<i32>} : memref<1x8x128xf32, #tpu.memory_space<vmem>>, vector<1x8x128xf32>,
    return
  }
  func.func @transform_0(%arg0: i32) -> (i32, i32) {
    %c0_i32 = arith.constant 0 : i32
    %c0_i32_0 = arith.constant 0 : i32
    return %arg0, %c0_i32 : i32, i32
  }
  func.func @transform_1(%arg0: i32) -> (i32, i32, i32) {
    %c0_i32 = arith.constant 0 : i32
    %c0_i32_0 = arith.constant 0 : i32
    %c0_i32_1 = arith.constant 0 : i32
    %c0_i32_2 = arith.constant 0 : i32
    return %c0_i32, %c0_i32_0, %c0_i32_1 : i32, i32, i32
  }
  func.func @transform_2(%arg0: i32) -> (i32, i32) {
    %c0_i32 = arith.constant 0 : i32
    %c0_i32_0 = arith.constant 0 : i32
    %c0_i32_1 = arith.constant 0 : i32
    return %c0_i32, %c0_i32_0 : i32, i32
  }
  func.func @transform_3(%arg0: i32) -> (i32, i32, i32) {
    %c0_i32 = arith.constant 0 : i32
    %c0_i32_0 = arith.constant 0 : i32
    %c0_i32_1 = arith.constant 0 : i32
    return %arg0, %c0_i32, %c0_i32_0 : i32, i32, i32
  }
}

module attributes {stable_mosaic.version = 11 : i64} {
  func.func @_mulcon_kernel(%arg0: i32, %arg1: memref<8x1xi32, #tpu.memory_space<vmem>>, %arg2: memref<1x1x8xi32, #tpu.memory_space<vmem>>, %arg3: memref<8x32xf32, #tpu.memory_space<vmem>>, %arg4: memref<1x8x128xf32, #tpu.memory_space<vmem>>, %arg5: memref<1x8x8xf32, #tpu.memory_space<vmem>>) attributes {dimension_semantics = [#tpu.dimension_semantics<parallel>], iteration_bounds = array<i64: 1>, scalar_prefetch = 0 : i64, scratch_operands = 1 : i64, tpu.core_type = #tpu.core_type<tc>, window_params = [{transform_indices = @transform_0, window_bounds = array<i64: 8, 1>}, {pipeline_mode = #tpu.pipeline_mode<synchronous>, transform_indices = @transform_1, window_bounds = array<i64: 1, 1, 8>}, {pipeline_mode = #tpu.pipeline_mode<synchronous>, transform_indices = @transform_2, window_bounds = array<i64: 8, 32>}, {transform_indices = @transform_3, window_bounds = array<i64: 1, 8, 128>}]} {
    %c8_i32 = arith.constant 8 : i32
    %0 = arith.muli %arg0, %c8_i32 : i32
    %1 = tpu.assume_multiple %0, 8 : i32
    %2 = arith.index_cast %1 : i32 to index
    %c0 = arith.constant 0 : index
    %3 = vector.load %arg3[%2, %c0] : memref<8x32xf32, #tpu.memory_space<vmem>>, vector<8x32xf32>
    %c0_0 = arith.constant 0 : index
    %c0_1 = arith.constant 0 : index
    %4 = vector.load %arg1[%c0_0, %c0_1] : memref<8x1xi32, #tpu.memory_space<vmem>>, vector<8x1xi32>
    %c0_i32 = arith.constant 0 : i32
    %5 = vector.broadcast %c0_i32 : i32 to vector<8x1xi32>
    %6 = arith.cmpi sge, %4, %5 : vector<8x1xi32>
    %c8_i32_2 = arith.constant 8 : i32
    %7 = arith.muli %arg0, %c8_i32_2 : i32
    %8 = tpu.iota {dimensions = array<i32: 0>} : vector<8x1xi32>
    %9 = vector.broadcast %7 : i32 to vector<8x1xi32>
    %10 = arith.addi %9, %8 : vector<8x1xi32>
    %cst = arith.constant 0.000000e+00 : f32
    %11 = vector.broadcast %cst : f32 to vector<8x1xf32>
    %c0_3 = arith.constant 0 : index
    %c0_4 = arith.constant 0 : index
    %c0_5 = arith.constant 0 : index
    %12 = vector.load %arg2[%c0_3, %c0_4, %c0_5] : memref<1x1x8xi32, #tpu.memory_space<vmem>>, vector<1x1x8xi32>
    %13 = vector.shape_cast %12 : vector<1x1x8xi32> to vector<1x8xi32>
    %14 = tpu.iota {dimensions = array<i32: 1>} : vector<1x8xi32>
    %c0_i32_6 = arith.constant 0 : i32
    %15 = vector.broadcast %c0_i32_6 : i32 to vector<1x8xi32>
    %16 = arith.addi %15, %14 : vector<1x8xi32>
    %c0_i32_7 = arith.constant 0 : i32
    %17 = vector.broadcast %c0_i32_7 : i32 to vector<1x8xi32>
    %18 = arith.cmpi sge, %13, %17 : vector<1x8xi32>
    %19 = vector.broadcast %6 : vector<8x1xi1> to vector<8x8xi1>
    %20 = vector.broadcast %18 : vector<1x8xi1> to vector<8x8xi1>
    %21 = arith.andi %19, %20 : vector<8x8xi1>
    %22 = vector.broadcast %10 : vector<8x1xi32> to vector<8x8xi32>
    %23 = vector.broadcast %16 : vector<1x8xi32> to vector<8x8xi32>
    %24 = arith.cmpi ne, %22, %23 : vector<8x8xi32>
    %25 = arith.andi %21, %24 : vector<8x8xi1>
    %c0_8 = arith.constant 0 : index
    %c0_9 = arith.constant 0 : index
    %26 = vector.load %arg3[%c0_8, %c0_9] : memref<8x32xf32, #tpu.memory_space<vmem>>, vector<8x32xf32>
    %cst_10 = arith.constant dense<0.000000e+00> : vector<8x8xf32>
    %27 = tpu.matmul %3, %26, %cst_10 {dimension_numbers = #tpu.dot_dimension_numbers<[1], [1], [0], [0], [0, 0, 1, 0], [], []>} : vector<8x32xf32>, vector<8x32xf32>, vector<8x8xf32> -> vector<8x8xf32>
    %c0_11 = arith.constant 0 : index
    %c0_12 = arith.constant 0 : index
    %c0_13 = arith.constant 0 : index
    %28 = vector.load %arg5[%c0_11, %c0_12, %c0_13] : memref<1x8x8xf32, #tpu.memory_space<vmem>>, vector<1x8x8xf32>
    %29 = vector.shape_cast %28 : vector<1x8x8xf32> to vector<8x8xf32>
    %30 = vector.shape_cast %27 : vector<8x8xf32> to vector<1x8x8xf32>
    tpu.vector_store %arg5[%c0_11, %c0_12, %c0_13], %30 {strides = array<i32>} : memref<1x8x8xf32, #tpu.memory_space<vmem>>, vector<1x8x8xf32>,
    %31 = vector.broadcast %4 : vector<8x1xi32> to vector<8x8xi32>
    %32 = vector.broadcast %13 : vector<1x8xi32> to vector<8x8xi32>
    %33 = arith.cmpi ne, %31, %32 : vector<8x8xi32>
    %34 = arith.andi %25, %33 : vector<8x8xi1>
    %cst_14 = arith.constant 2.000000e+00 : f32
    %35 = vector.broadcast %cst_14 : f32 to vector<8x8xf32>
    %36 = arith.mulf %27, %35 : vector<8x8xf32>
    %37 = math.exp %36 : vector<8x8xf32>
    %cst_15 = arith.constant 0.000000e+00 : f32
    %38 = vector.broadcast %cst_15 : f32 to vector<8x8xf32>
    %39 = arith.select %34, %37, %38 : vector<8x8xi1>, vector<8x8xf32>
    %cst_16 = arith.constant dense<0.000000e+00> : vector<8xf32>
    %40 = vector.multi_reduction <add>, %39, %cst_16 [1] : vector<8x8xf32> to vector<8xf32>
    %41 = vector.shape_cast %40 : vector<8xf32> to vector<8x1xf32>
    %42 = arith.addf %11, %41 : vector<8x1xf32>
    %cst_17 = arith.constant 0.000000e+00 : f32
    %43 = vector.broadcast %cst_17 : f32 to vector<8x1xf32>
    %c0_18 = arith.constant 0 : index
    %c0_19 = arith.constant 0 : index
    %c0_20 = arith.constant 0 : index
    %44 = vector.load %arg2[%c0_18, %c0_19, %c0_20] : memref<1x1x8xi32, #tpu.memory_space<vmem>>, vector<1x1x8xi32>
    %45 = vector.shape_cast %44 : vector<1x1x8xi32> to vector<1x8xi32>
    %46 = tpu.iota {dimensions = array<i32: 1>} : vector<1x8xi32>
    %c0_i32_21 = arith.constant 0 : i32
    %47 = vector.broadcast %c0_i32_21 : i32 to vector<1x8xi32>
    %48 = arith.addi %47, %46 : vector<1x8xi32>
    %c0_i32_22 = arith.constant 0 : i32
    %49 = vector.broadcast %c0_i32_22 : i32 to vector<1x8xi32>
    %50 = arith.cmpi sge, %45, %49 : vector<1x8xi32>
    %51 = vector.broadcast %6 : vector<8x1xi1> to vector<8x8xi1>
    %52 = vector.broadcast %50 : vector<1x8xi1> to vector<8x8xi1>
    %53 = arith.andi %51, %52 : vector<8x8xi1>
    %54 = vector.broadcast %10 : vector<8x1xi32> to vector<8x8xi32>
    %55 = vector.broadcast %48 : vector<1x8xi32> to vector<8x8xi32>
    %56 = arith.cmpi ne, %54, %55 : vector<8x8xi32>
    %57 = arith.andi %53, %56 : vector<8x8xi1>
    %c0_23 = arith.constant 0 : index
    %c0_24 = arith.constant 0 : index
    %c0_25 = arith.constant 0 : index
    %58 = vector.load %arg5[%c0_23, %c0_24, %c0_25] : memref<1x8x8xf32, #tpu.memory_space<vmem>>, vector<1x8x8xf32>
    %59 = vector.shape_cast %58 : vector<1x8x8xf32> to vector<8x8xf32>
    %60 = vector.broadcast %4 : vector<8x1xi32> to vector<8x8xi32>
    %61 = vector.broadcast %45 : vector<1x8xi32> to vector<8x8xi32>
    %62 = arith.cmpi eq, %60, %61 : vector<8x8xi32>
    %63 = arith.andi %57, %62 : vector<8x8xi1>
    %cst_26 = arith.constant 2.000000e+00 : f32
    %64 = vector.broadcast %cst_26 : f32 to vector<8x8xf32>
    %65 = arith.mulf %59, %64 : vector<8x8xf32>
    %66 = math.exp %65 : vector<8x8xf32>
    %67 = vector.broadcast %42 : vector<8x1xf32> to vector<8x8xf32>
    %68 = arith.addf %66, %67 : vector<8x8xf32>
    %cst_27 = arith.constant 1.000000e+00 : f32
    %69 = vector.broadcast %cst_27 : f32 to vector<8x8xf32>
    %70 = arith.select %63, %68, %69 : vector<8x8xi1>, vector<8x8xf32>
    %71 = math.log %70 : vector<8x8xf32>
    %cst_28 = arith.constant 2.000000e+00 : f32
    %72 = vector.broadcast %cst_28 : f32 to vector<8x8xf32>
    %73 = arith.mulf %59, %72 : vector<8x8xf32>
    %74 = arith.subf %71, %73 : vector<8x8xf32>
    %cst_29 = arith.constant 0.000000e+00 : f32
    %75 = vector.broadcast %cst_29 : f32 to vector<8x8xf32>
    %76 = arith.select %63, %74, %75 : vector<8x8xi1>, vector<8x8xf32>
    %cst_30 = arith.constant dense<0.000000e+00> : vector<8xf32>
    %77 = vector.multi_reduction <add>, %76, %cst_30 [1] : vector<8x8xf32> to vector<8xf32>
    %78 = vector.shape_cast %77 : vector<8xf32> to vector<8x1xf32>
    %79 = arith.addf %43, %78 : vector<8x1xf32>
    %80 = vector.shape_cast %79 : vector<8x1xf32> to vector<1x8x1xf32>
    %cst_31 = arith.constant dense<0.000000e+00> : vector<1xf32>
    %81 = vector.multi_reduction <add>, %80, %cst_31 [1, 2] : vector<1x8x1xf32> to vector<1xf32>
    %82 = vector.shape_cast %81 : vector<1xf32> to vector<1x1x1xf32>
    %83 = vector.extract %82[0, 0, 0] : f32 from vector<1x1x1xf32>
    %84 = vector.broadcast %83 : f32 to vector<1x8x128xf32>
    %c0_32 = arith.constant 0 : index
    %c0_33 = arith.constant 0 : index
    %c0_34 = arith.constant 0 : index
    %85 = vector.load %arg4[%c0_32, %c0_33, %c0_34] : memref<1x8x128xf32, #tpu.memory_space<vmem>>, vector<1x8x128xf32>
    tpu.vector_store %arg4[%c0_32, %c0_33, %c0_34], %84 {strides = array<i32>} : memref<1x8x128xf32, #tpu.memory_space<vmem>>, vector<1x8x128xf32>,
    return
  }
  func.func @transform_0(%arg0: i32) -> (i32, i32) {
    %c0_i32 = arith.constant 0 : i32
    %c0_i32_0 = arith.constant 0 : i32
    return %arg0, %c0_i32 : i32, i32
  }
  func.func @transform_1(%arg0: i32) -> (i32, i32, i32) {
    %c0_i32 = arith.constant 0 : i32
    %c0_i32_0 = arith.constant 0 : i32
    %c0_i32_1 = arith.constant 0 : i32
    %c0_i32_2 = arith.constant 0 : i32
    return %c0_i32, %c0_i32_0, %c0_i32_1 : i32, i32, i32
  }
  func.func @transform_2(%arg0: i32) -> (i32, i32) {
    %c0_i32 = arith.constant 0 : i32
    %c0_i32_0 = arith.constant 0 : i32
    %c0_i32_1 = arith.constant 0 : i32
    return %c0_i32, %c0_i32_0 : i32, i32
  }
  func.func @transform_3(%arg0: i32) -> (i32, i32, i32) {
    %c0_i32 = arith.constant 0 : i32
    %c0_i32_0 = arith.constant 0 : i32
    %c0_i32_1 = arith.constant 0 : i32
    return %arg0, %c0_i32, %c0_i32_0 : i32, i32, i32
  }
}

</mosaic_0001>

<llo_original>
// kernel: _mulcon_impl.1
$region0: #{_mulcon_impl.1}
  #allocation0 [shape = 'u32[]', space=smem, size = 0x4, offset = 0x4, fixed_abs, tag = 'smem constant byte address 0x4 - core index']
  #allocation1 [shape = 'u32[144,128]{1,0:T(1,128)}', space=vmem, size = 0x12000, scoped, tag = 'internal scratch']
  #allocation2 [shape = 'f32[1,8,8]{2,1,0:T(8,128)}', space=vmem, size = 0x1000, scoped, tag = 'scratch operand']
  %s0 = inlined_call_operand.vmem [shape: s32[8,1], index: 0, kind: input, shape index: {}]
  %s1 = inlined_call_operand.vmem [shape: s32[1,1,8], index: 1, kind: input, shape index: {}]
  %s2 = inlined_call_operand.vmem [shape: f32[8,32], index: 2, kind: input, shape index: {}]
  %s3 = inlined_call_operand.vmem [shape: f32[1,8,128], index: 3, kind: output, shape index: {}]
  %s4 = sld [smem:[#allocation0]]
  $region22: #{_mulcon_impl.1} parent=0
    _
  %s6 = ssub.s32 1, %s4
  %s7 = scalar_select 0, %s6, %s4
  // Predicated region
  $region2: #{_mulcon_impl.1} parent=0 // pred_check
    _
  $region3: #{_mulcon_impl.1} parent=0 // pred_check_branch
    %9 = sbr.rel (0) target = $region5
  $region4: #{_mulcon_impl.1} parent=0 // pred_region
    _
  $region5: #{_mulcon_impl.1} parent=0 // pred_fallthru
    _
  // Predicated region
  $region6: #{_mulcon_impl.1} parent=0 // pred_check
    _
  $region7: #{_mulcon_impl.1} parent=0 // pred_check_branch
    %11 = sbr.rel (0) target = $region9
  $region8: #{_mulcon_impl.1} parent=0 // pred_region
    _
  $region9: #{_mulcon_impl.1} parent=0 // pred_fallthru
    _
  // Predicated region
  $region10: #{_mulcon_impl.1} parent=0 // pred_check
    _
  $region11: #{_mulcon_impl.1} parent=0 // pred_check_branch
    %13 = sbr.rel (0) target = $region13
  $region12: #{_mulcon_impl.1} parent=0 // pred_region
    _
  $region13: #{_mulcon_impl.1} parent=0 // pred_fallthru
    _
  %s14 = smul.u32 0, 8
  %s15 = scalar_lea.vmem %s2, %s14
  %v16 = vld [vmem:[%s15] sm:$0xff]
  %v17 = vld [vmem:[%s0] sm:$0xff]
  %vm18 = vcmp.ge.s32.totalorder %v17, 0
  %v19 = vlaneseq
  %v20 = vshrl.u32 %v19, 7
  %v21 = vstv %s14
  %v22 = vadd.s32 %v21, %v20
  %v23 = vld [vmem:[%s1] sm:$0x1]
  %v24 = vlaneseq
  %v25 = vand.u32 %v24, 127
  %vm26 = vcmp.ge.s32.totalorder %v23, 0
  %v27 = vsel %vm18, 1, 0
  %28 = vset.pattern.permute.xlu0 0
  %29 = vperm.xlu0 %28, %v27
  %v30 = vpop.permute.xlu0 %29
  %vm31 = vcmp.eq.s32.totalorder %v30, 1
  %v32 = vsel %vm26, 1, 0
  %v33 = vlaneseq
  %v34 = vshrl.u32 %v33, 7
  %v35 = vsub.s32 0, %v34
  %v36 = vrot.slane %v32, %v35
  %vm37 = vcmp.eq.s32.totalorder %v36, 1
  %vm38 = vmand %vm31, %vm37
  %vm39 = vcmp.ne.s32.totalorder %v22, %v25
  %vm40 = vmand %vm38, %vm39
  %v41 = vld [vmem:[%s2] sm:$0xff]
  %vm42 = vcmask 261120
  %v44 = vsel %vm42, %v16, 0
  %v47 = vsel %vm42, %v41, 0
  %49 = vmatprep.subr.mxu0 0.0
  %50 = vmatpush1.xpose.msra.mxu0 %v47
  %51 = vmatprep.subr.mxu0 0.0
  %52 = vmatpush1.xpose.msra.mxu0 0.0
  %53 = vmatprep.subr.mxu0 0.0
  %54 = vmatpush1.xpose.msra.mxu0 0.0
  %55 = vmatprep.subr.mxu0 0.0
  %56 = vmatpush1.xpose.msra.mxu0 0.0
  %57 = vmatprep.subr.mxu0 0.0
  %58 = vmatpush1.xpose.msra.mxu0 0.0
  %59 = vmatprep.subr.mxu0 0.0
  %60 = vmatpush1.xpose.msra.mxu0 0.0
  %61 = vmatprep.subr.mxu0 0.0
  %62 = vmatpush1.xpose.msra.mxu0 0.0
  %63 = vmatprep.subr.mxu0 0.0
  %64 = vmatpush1.xpose.msra.mxu0 0.0
  %65 = vmatprep.subr.mxu0 0.0
  %66 = vmatpush1.xpose.msra.mxu0 0.0
  %67 = vmatprep.subr.mxu0 0.0
  %68 = vmatpush1.xpose.msra.mxu0 0.0
  %69 = vmatprep.subr.mxu0 0.0
  %70 = vmatpush1.xpose.msra.mxu0 0.0
  %71 = vmatprep.subr.mxu0 0.0
  %72 = vmatpush1.xpose.msra.mxu0 0.0
  %73 = vmatprep.subr.mxu0 0.0
  %74 = vmatpush1.xpose.msra.mxu0 0.0
  %75 = vmatprep.subr.mxu0 0.0
  %76 = vmatpush1.xpose.msra.mxu0 0.0
  %77 = vmatprep.subr.mxu0 0.0
  %78 = vmatpush1.xpose.msra.mxu0 0.0
  %79 = vmatprep.subr.mxu0 0.0
  %80 = vmatpush1.xpose.msra.mxu0 0.0
  %81 = vmatprep.subr.mxu0 0.0
  %82 = vmatpush1.xpose.msra.mxu0 0.0
  %83 = vmatprep.subr.mxu0 0.0
  %84 = vmatpush1.xpose.msra.mxu0 0.0
  %85 = vmatprep.subr.mxu0 0.0
  %86 = vmatpush1.xpose.msra.mxu0 0.0
  %87 = vmatprep.subr.mxu0 0.0
  %88 = vmatpush1.xpose.msra.mxu0 0.0
  %89 = vmatprep.subr.mxu0 0.0
  %90 = vmatpush1.xpose.msra.mxu0 0.0
  %91 = vmatprep.subr.mxu0 0.0
  %92 = vmatpush1.xpose.msra.mxu0 0.0
  %93 = vmatprep.subr.mxu0 0.0
  %94 = vmatpush1.xpose.msra.mxu0 0.0
  %95 = vmatprep.subr.mxu0 0.0
  %96 = vmatpush1.xpose.msra.mxu0 0.0
  %97 = vmatprep.subr.mxu0 0.0
  %98 = vmatpush1.xpose.msra.mxu0 0.0
  %99 = vmatprep.subr.mxu0 0.0
  %100 = vmatpush1.xpose.msra.mxu0 0.0
  %101 = vmatprep.subr.mxu0 0.0
  %102 = vmatpush1.xpose.msra.mxu0 0.0
  %103 = vmatprep.subr.mxu0 0.0
  %104 = vmatpush1.xpose.msra.mxu0 0.0
  %105 = vmatprep.subr.mxu0 0.0
  %106 = vmatpush1.xpose.msra.mxu0 0.0
  %107 = vmatprep.subr.mxu0 0.0
  %108 = vmatpush1.xpose.msra.mxu0 0.0
  %109 = vmatprep.subr.mxu0 0.0
  %110 = vmatpush1.xpose.msra.mxu0 0.0
  %111 = vmatprep.subr.mxu0 0.0
  %112 = vmatpush1.xpose.msra.mxu0 0.0
  %113 = vmatprep.mubr.f32.mxu0 0.0
  %114 = vmatmul.mubr.f32.gmra.mrb[0].mxu0 %v44
  %v115 = vpop.f32.mrb[0].mxu0
  %v116 = vadd.f32 0.0, %v115
  %v117 = vpop.f32.mrb[0].mxu0
  %118 = vdwg.mxu0
  %vm119 = vcmask 64512
  %120 = vst.msk [vmem:[#allocation2] sm:$0xff] %vm119, %v116
  %121 = vset.pattern.permute.xlu0 0
  %122 = vperm.xlu0 %121, %v17
  %v123 = vpop.permute.xlu0 %122
  %v124 = vlaneseq
  %v125 = vshrl.u32 %v124, 7
  %v126 = vsub.s32 0, %v125
  %v127 = vrot.slane %v23, %v126
  %vm128 = vcmp.ne.s32.totalorder %v123, %v127
  %vm129 = vmand %vm40, %vm128
  %v130 = vmul.f32 %v116, 2.0
  %v131 = vmul.f32 %v130, 1.442695
  %v132 = vpow.pop %v131
  %v133 = vsel %vm129, %v132, 0.0
  %v134 = vsel %vm119, %v133, 0.0
  %135 = vadd.xlane.f32.xlu0 %v134
  %v136 = vpop.xlane.xlu0 %135
  %v137 = vadd.f32 %v136, 0.0
  %v138 = vld [vmem:[%s1] sm:$0x1]
  %vm139 = vcmp.ge.s32.totalorder %v138, 0
  %v140 = vsel %vm139, 1, 0
  %v141 = vlaneseq
  %v142 = vshrl.u32 %v141, 7
  %v143 = vsub.s32 0, %v142
  %v144 = vrot.slane %v140, %v143
  %vm145 = vcmp.eq.s32.totalorder %v144, 1
  %vm146 = vmand %vm31, %vm145
  %vm147 = vmand %vm146, %vm39
  %v148 = vld [vmem:[#allocation2] sm:$0xff]
  %v149 = vlaneseq
  %v150 = vshrl.u32 %v149, 7
  %v151 = vsub.s32 0, %v150
  %v152 = vrot.slane %v138, %v151
  %vm153 = vcmp.eq.s32.totalorder %v123, %v152
  %vm154 = vmand %vm147, %vm153
  %v155 = vmul.f32 %v148, 2.0
  %v156 = vmul.f32 %v155, 1.442695
  %v157 = vpow.pop %v156
  %v158 = vadd.f32 %v157, %v137
  %v159 = vsel %vm154, %v158, 1.0
  %v160 = vlog2.pop %v159
  %v161 = vmul.f32 %v160, 0.6931472
  %v162 = vsub.f32 %v161, %v155
  %v163 = vsel %vm154, %v162, 0.0
  %v164 = vsel %vm119, %v163, 0.0
  %165 = vadd.xlane.f32.xlu0 %v164
  %v166 = vpop.xlane.xlu0 %165
  %v167 = vadd.f32 %v166, 0.0
  %vm168 = vcmask 7168
  %v169 = vsel %vm168, %v167, 0.0
  %170 = vadd.xlane.f32.xlu0 %v169
  %v171 = vpop.xlane.xlu0 %170
  %v172 = vrot.slane %v171, 4
  %v173 = vadd.f32 %v171, %v172
  %v174 = vrot.slane %v173, 2
  %v175 = vadd.f32 %v173, %v174
  %v176 = vrot.slane %v175, 1
  %v177 = vadd.f32 %v175, %v176
  %s178 = vtos %v177
  %v179 = vstv %s178
  %180 = vst [vmem:[%s3] sm:$0xff] %v179
  // Predicated region
  $region14: #{_mulcon_impl.1} parent=0 // pred_check
    _
  $region15: #{_mulcon_impl.1} parent=0 // pred_check_branch
    %182 = sbr.rel (0) target = $region17
  $region16: #{_mulcon_impl.1} parent=0 // pred_region
    _
  $region17: #{_mulcon_impl.1} parent=0 // pred_fallthru
    _
  // Predicated region
  $region18: #{_mulcon_impl.1} parent=0 // pred_check
    _
  $region19: #{_mulcon_impl.1} parent=0 // pred_check_branch
    %184 = sbr.rel (0) target = $region21
  $region20: #{_mulcon_impl.1} parent=0 // pred_region
    _
  $region21: #{_mulcon_impl.1} parent=0 // pred_fallthru
    _

// kernel: _mulcon_impl.1
$region0: #{_mulcon_impl.1}
  #allocation0 [shape = 'u32[]', space=smem, size = 0x4, offset = 0x4, fixed_abs, tag = 'smem constant byte address 0x4 - core index']
  #allocation1 [shape = 'u32[144,128]{1,0:T(1,128)}', space=vmem, size = 0x12000, scoped, tag = 'internal scratch']
  #allocation2 [shape = 'f32[1,8,8]{2,1,0:T(8,128)}', space=vmem, size = 0x1000, scoped, tag = 'scratch operand']
  %s0 = inlined_call_operand.vmem [shape: s32[8,1], index: 0, kind: input, shape index: {}]
  %s1 = inlined_call_operand.vmem [shape: s32[1,1,8], index: 1, kind: input, shape index: {}]
  %s2 = inlined_call_operand.vmem [shape: f32[8,32], index: 2, kind: input, shape index: {}]
  %s3 = inlined_call_operand.vmem [shape: f32[1,8,128], index: 3, kind: output, shape index: {}]
  %s4 = sld [smem:[#allocation0]]
  $region22: #{_mulcon_impl.1} parent=0
    _
  %s6 = ssub.s32 1, %s4
  %s7 = scalar_select 0, %s6, %s4
  // Predicated region
  $region2: #{_mulcon_impl.1} parent=0 // pred_check
    _
  $region3: #{_mulcon_impl.1} parent=0 // pred_check_branch
    %9 = sbr.rel (0) target = $region5
  $region4: #{_mulcon_impl.1} parent=0 // pred_region
    _
  $region5: #{_mulcon_impl.1} parent=0 // pred_fallthru
    _
  // Predicated region
  $region6: #{_mulcon_impl.1} parent=0 // pred_check
    _
  $region7: #{_mulcon_impl.1} parent=0 // pred_check_branch
    %11 = sbr.rel (0) target = $region9
  $region8: #{_mulcon_impl.1} parent=0 // pred_region
    _
  $region9: #{_mulcon_impl.1} parent=0 // pred_fallthru
    _
  // Predicated region
  $region10: #{_mulcon_impl.1} parent=0 // pred_check
    _
  $region11: #{_mulcon_impl.1} parent=0 // pred_check_branch
    %13 = sbr.rel (0) target = $region13
  $region12: #{_mulcon_impl.1} parent=0 // pred_region
    _
  $region13: #{_mulcon_impl.1} parent=0 // pred_fallthru
    _
  %s14 = smul.u32 0, 8
  %s15 = scalar_lea.vmem %s2, %s14
  %v16 = vld [vmem:[%s15] sm:$0xff]
  %v17 = vld [vmem:[%s0] sm:$0xff]
  %vm18 = vcmp.ge.s32.totalorder %v17, 0
  %v19 = vlaneseq
  %v20 = vshrl.u32 %v19, 7
  %v21 = vstv %s14
  %v22 = vadd.s32 %v21, %v20
  %v23 = vld [vmem:[%s1] sm:$0x1]
  %v24 = vlaneseq
  %v25 = vand.u32 %v24, 127
  %vm26 = vcmp.ge.s32.totalorder %v23, 0
  %v27 = vsel %vm18, 1, 0
  %28 = vset.pattern.permute.xlu0 0
  %29 = vperm.xlu0 %28, %v27
  %v30 = vpop.permute.xlu0 %29
  %vm31 = vcmp.eq.s32.totalorder %v30, 1
  %v32 = vsel %vm26, 1, 0
  %v33 = vlaneseq
  %v34 = vshrl.u32 %v33, 7
  %v35 = vsub.s32 0, %v34
  %v36 = vrot.slane %v32, %v35
  %vm37 = vcmp.eq.s32.totalorder %v36, 1
  %vm38 = vmand %vm31, %vm37
  %vm39 = vcmp.ne.s32.totalorder %v22, %v25
  %vm40 = vmand %vm38, %vm39
  %v41 = vld [vmem:[%s2] sm:$0xff]
  %vm42 = vcmask 261120
  %v44 = vsel %vm42, %v16, 0
  %v47 = vsel %vm42, %v41, 0
  %49 = vmatprep.subr.mxu0 0.0
  %50 = vmatpush1.xpose.msra.mxu0 %v47
  %51 = vmatprep.subr.mxu0 0.0
  %52 = vmatpush1.xpose.msra.mxu0 0.0
  %53 = vmatprep.subr.mxu0 0.0
  %54 = vmatpush1.xpose.msra.mxu0 0.0
  %55 = vmatprep.subr.mxu0 0.0
  %56 = vmatpush1.xpose.msra.mxu0 0.0
  %57 = vmatprep.subr.mxu0 0.0
  %58 = vmatpush1.xpose.msra.mxu0 0.0
  %59 = vmatprep.subr.mxu0 0.0
  %60 = vmatpush1.xpose.msra.mxu0 0.0
  %61 = vmatprep.subr.mxu0 0.0
  %62 = vmatpush1.xpose.msra.mxu0 0.0
  %63 = vmatprep.subr.mxu0 0.0
  %64 = vmatpush1.xpose.msra.mxu0 0.0
  %65 = vmatprep.subr.mxu0 0.0
  %66 = vmatpush1.xpose.msra.mxu0 0.0
  %67 = vmatprep.subr.mxu0 0.0
  %68 = vmatpush1.xpose.msra.mxu0 0.0
  %69 = vmatprep.subr.mxu0 0.0
  %70 = vmatpush1.xpose.msra.mxu0 0.0
  %71 = vmatprep.subr.mxu0 0.0
  %72 = vmatpush1.xpose.msra.mxu0 0.0
  %73 = vmatprep.subr.mxu0 0.0
  %74 = vmatpush1.xpose.msra.mxu0 0.0
  %75 = vmatprep.subr.mxu0 0.0
  %76 = vmatpush1.xpose.msra.mxu0 0.0
  %77 = vmatprep.subr.mxu0 0.0
  %78 = vmatpush1.xpose.msra.mxu0 0.0
  %79 = vmatprep.subr.mxu0 0.0
  %80 = vmatpush1.xpose.msra.mxu0 0.0
  %81 = vmatprep.subr.mxu0 0.0
  %82 = vmatpush1.xpose.msra.mxu0 0.0
  %83 = vmatprep.subr.mxu0 0.0
  %84 = vmatpush1.xpose.msra.mxu0 0.0
  %85 = vmatprep.subr.mxu0 0.0
  %86 = vmatpush1.xpose.msra.mxu0 0.0
  %87 = vmatprep.subr.mxu0 0.0
  %88 = vmatpush1.xpose.msra.mxu0 0.0
  %89 = vmatprep.subr.mxu0 0.0
  %90 = vmatpush1.xpose.msra.mxu0 0.0
  %91 = vmatprep.subr.mxu0 0.0
  %92 = vmatpush1.xpose.msra.mxu0 0.0
  %93 = vmatprep.subr.mxu0 0.0
  %94 = vmatpush1.xpose.msra.mxu0 0.0
  %95 = vmatprep.subr.mxu0 0.0
  %96 = vmatpush1.xpose.msra.mxu0 0.0
  %97 = vmatprep.subr.mxu0 0.0
  %98 = vmatpush1.xpose.msra.mxu0 0.0
  %99 = vmatprep.subr.mxu0 0.0
  %100 = vmatpush1.xpose.msra.mxu0 0.0
  %101 = vmatprep.subr.mxu0 0.0
  %102 = vmatpush1.xpose.msra.mxu0 0.0
  %103 = vmatprep.subr.mxu0 0.0
  %104 = vmatpush1.xpose.msra.mxu0 0.0
  %105 = vmatprep.subr.mxu0 0.0
  %106 = vmatpush1.xpose.msra.mxu0 0.0
  %107 = vmatprep.subr.mxu0 0.0
  %108 = vmatpush1.xpose.msra.mxu0 0.0
  %109 = vmatprep.subr.mxu0 0.0
  %110 = vmatpush1.xpose.msra.mxu0 0.0
  %111 = vmatprep.subr.mxu0 0.0
  %112 = vmatpush1.xpose.msra.mxu0 0.0
  %113 = vmatprep.mubr.f32.mxu0 0.0
  %114 = vmatmul.mubr.f32.gmra.mrb[0].mxu0 %v44
  %v115 = vpop.f32.mrb[0].mxu0
  %v116 = vadd.f32 0.0, %v115
  %v117 = vpop.f32.mrb[0].mxu0
  %118 = vdwg.mxu0
  %vm119 = vcmask 64512
  %120 = vst.msk [vmem:[#allocation2] sm:$0xff] %vm119, %v116
  %121 = vset.pattern.permute.xlu0 0
  %122 = vperm.xlu0 %121, %v17
  %v123 = vpop.permute.xlu0 %122
  %v124 = vlaneseq
  %v125 = vshrl.u32 %v124, 7
  %v126 = vsub.s32 0, %v125
  %v127 = vrot.slane %v23, %v126
  %vm128 = vcmp.ne.s32.totalorder %v123, %v127
  %vm129 = vmand %vm40, %vm128
  %v130 = vmul.f32 %v116, 2.0
  %v131 = vmul.f32 %v130, 1.442695
  %v132 = vpow.pop %v131
  %v133 = vsel %vm129, %v132, 0.0
  %v134 = vsel %vm119, %v133, 0.0
  %135 = vadd.xlane.f32.xlu0 %v134
  %v136 = vpop.xlane.xlu0 %135
  %v137 = vadd.f32 %v136, 0.0
  %v138 = vld [vmem:[%s1] sm:$0x1]
  %vm139 = vcmp.ge.s32.totalorder %v138, 0
  %v140 = vsel %vm139, 1, 0
  %v141 = vlaneseq
  %v142 = vshrl.u32 %v141, 7
  %v143 = vsub.s32 0, %v142
  %v144 = vrot.slane %v140, %v143
  %vm145 = vcmp.eq.s32.totalorder %v144, 1
  %vm146 = vmand %vm31, %vm145
  %vm147 = vmand %vm146, %vm39
  %v148 = vld [vmem:[#allocation2] sm:$0xff]
  %v149 = vlaneseq
  %v150 = vshrl.u32 %v149, 7
  %v151 = vsub.s32 0, %v150
  %v152 = vrot.slane %v138, %v151
  %vm153 = vcmp.eq.s32.totalorder %v123, %v152
  %vm154 = vmand %vm147, %vm153
  %v155 = vmul.f32 %v148, 2.0
  %v156 = vmul.f32 %v155, 1.442695
  %v157 = vpow.pop %v156
  %v158 = vadd.f32 %v157, %v137
  %v159 = vsel %vm154, %v158, 1.0
  %v160 = vlog2.pop %v159
  %v161 = vmul.f32 %v160, 0.6931472
  %v162 = vsub.f32 %v161, %v155
  %v163 = vsel %vm154, %v162, 0.0
  %v164 = vsel %vm119, %v163, 0.0
  %165 = vadd.xlane.f32.xlu0 %v164
  %v166 = vpop.xlane.xlu0 %165
  %v167 = vadd.f32 %v166, 0.0
  %vm168 = vcmask 7168
  %v169 = vsel %vm168, %v167, 0.0
  %170 = vadd.xlane.f32.xlu0 %v169
  %v171 = vpop.xlane.xlu0 %170
  %v172 = vrot.slane %v171, 4
  %v173 = vadd.f32 %v171, %v172
  %v174 = vrot.slane %v173, 2
  %v175 = vadd.f32 %v173, %v174
  %v176 = vrot.slane %v175, 1
  %v177 = vadd.f32 %v175, %v176
  %s178 = vtos %v177
  %v179 = vstv %s178
  %180 = vst [vmem:[%s3] sm:$0xff] %v179
  // Predicated region
  $region14: #{_mulcon_impl.1} parent=0 // pred_check
    _
  $region15: #{_mulcon_impl.1} parent=0 // pred_check_branch
    %182 = sbr.rel (0) target = $region17
  $region16: #{_mulcon_impl.1} parent=0 // pred_region
    _
  $region17: #{_mulcon_impl.1} parent=0 // pred_fallthru
    _
  // Predicated region
  $region18: #{_mulcon_impl.1} parent=0 // pred_check
    _
  $region19: #{_mulcon_impl.1} parent=0 // pred_check_branch
    %184 = sbr.rel (0) target = $region21
  $region20: #{_mulcon_impl.1} parent=0 // pred_region
    _
  $region21: #{_mulcon_impl.1} parent=0 // pred_fallthru
    _

</llo_original>
